<compile_context>
chip_gen: v5e
topology: v5e:2x2
jax: 0.10.0
libtpu: 0.0.40
codegen_flags: <defaults>
</compile_context>

<pallas_src>
import functools

import jax
import jax.numpy as jnp
from jax.experimental import pallas as pl
from jax.experimental.pallas import tpu as pltpu


# ----------------------------- kernel ---------------------------------------


def _mmp_forward_kernel(w_ref,
                        we1_ref, be1_ref,
                        wmid_ref, bmid_ref,
                        wd2_ref, bd2_ref,
                        recon_ref):
    """Fused encoder+decoder on one batch tile.

    Matmul operands are bf16 with f32 MXU accumulation; bias adds / ReLU stay
    on the f32 accumulator (no bf16 VPU required -> v5e friendly).  The
    encoder-layer-2 / decoder-layer-1 pair is pre-folded into wmid/bmid.
    """
    # f32 -> bf16 cast in-kernel: a VPU pack op, free under the memory-bound
    # roofline, and it avoids a separate XLA pad/cast pass over w in HBM.
    x = w_ref[...].astype(jnp.bfloat16)                              # (tb, 186)

    # encoder layer 1: Linear -> ReLU
    h = jnp.dot(x, we1_ref[...], preferred_element_type=jnp.float32)
    h = jnp.maximum(h + be1_ref[...], 0.0)                           # f32 (tb, 128)

    # folded (encoder layer 2 @ decoder layer 1): Linear -> ReLU
    g = jnp.dot(h.astype(jnp.bfloat16), wmid_ref[...],
                preferred_element_type=jnp.float32)
    g = jnp.maximum(g + bmid_ref[...], 0.0)                          # f32 (tb, 128)

    # decoder layer 2: Linear
    recon = jnp.dot(g.astype(jnp.bfloat16), wd2_ref[...],
                    preferred_element_type=jnp.float32) + bd2_ref[...]

    recon_ref[...] = recon.astype(recon_ref.dtype)                   # (tb, 186)


# ----------------------------- wrapper ---------------------------------------


def _round_up(x, m):
    return ((x + m - 1) // m) * m


def _ceil_div(a, b):
    return -(-a // b)


def _pad2(a, rows, cols):
    return jnp.pad(a, ((0, rows - a.shape[0]), (0, cols - a.shape[1])))


def prepare_params(raw_params, *, h_pad=None):
    """Fold the latent matmul pair, zero-pad hidden to 128, cast weights to bf16.

    The feature dim (186) is left unpadded: the kernel blocks use the full
    array extent on that axis, so no input/output column padding is needed.
    """
    we1, be1, we2, be2, wd1, bd1, wd2, bd2 = raw_params
    in_dim, hidden = we1.shape
    h_pad = h_pad or _round_up(hidden, 128)       # 64 -> 128 (keep at 128!)

    # No nonlinearity between z = h@we2 + be2 and g_pre = z@wd1 + bd1 -> fold.
    w_mid = we2 @ wd1                              # (hidden, hidden)
    b_mid = be2 @ wd1 + bd1                        # (1, hidden)

    we1_p = _pad2(we1, in_dim, h_pad).astype(jnp.bfloat16)    # (186, 128)
    wmid_p = _pad2(w_mid, h_pad, h_pad).astype(jnp.bfloat16)  # (128, 128)
    wd2_p = _pad2(wd2, h_pad, in_dim).astype(jnp.bfloat16)    # (128, 186)
    be1_p = _pad2(be1, 1, h_pad).astype(jnp.float32)          # (1, 128)
    bmid_p = _pad2(b_mid, 1, h_pad).astype(jnp.float32)       # (1, 128)
    bd2_p = bd2.astype(jnp.float32)                           # (1, 186)
    return (we1_p, be1_p, wmid_p, bmid_p, wd2_p, bd2_p)


def _pick_tiling(bs, tile_b_max):
    """Choose (tile_b, n_steps): tile_b multiple of 16, padding waste bounded,
    and >=2 grid steps for large batches (v7x dual-TensorCore sharding)."""
    tile_b_max = max(16, _round_up(int(tile_b_max), 16))
    min_steps = 2 if bs >= 1024 else 1
    n_steps = max(min_steps, _ceil_div(bs, tile_b_max))
    tile_b = min(tile_b_max, _round_up(_ceil_div(bs, n_steps), 16))
    return tile_b, n_steps


@functools.partial(jax.jit, static_argnames=("tile_b_max",))
def se3mmp_forward(w, packed_params, *, tile_b_max=2048):
    """recon = decoder(encoder(w)) via the fused Pallas kernel."""
    we1_p, be1_p, wmid_p, bmid_p, wd2_p, bd2_p = packed_params
    bs, in_dim = w.shape
    h_pad = we1_p.shape[1]
    out_dim = wd2_p.shape[1]

    tile_b, n_steps = _pick_tiling(bs, tile_b_max)
    bs_pad = tile_b * n_steps

    # Only the batch axis is (possibly) padded; feature axis stays raw f32.
    w_in = w if bs_pad == bs else jnp.pad(w, ((0, bs_pad - bs), (0, 0)))

    weight_bytes = sum(int(p.size) * p.dtype.itemsize for p in packed_params)
    flops = 2 * bs_pad * (in_dim * h_pad + h_pad * h_pad + h_pad * out_dim)
    bytes_accessed = bs_pad * (in_dim + out_dim) * 4 + weight_bytes

    # Double-buffered in/out tiles + resident weights, with headroom.
    io_bytes_per_step = tile_b * (in_dim + out_dim) * 4
    vmem_limit = int(min(64 * 1024 * 1024,
                         max(16 * 1024 * 1024,
                             3 * io_bytes_per_step + 4 * weight_bytes)))

    out = pl.pallas_call(
        _mmp_forward_kernel,
        out_shape=jax.ShapeDtypeStruct((bs_pad, out_dim), jnp.float32),
        grid_spec=pltpu.PrefetchScalarGridSpec(
            num_scalar_prefetch=0,
            grid=(n_steps,),
            in_specs=[
                pl.BlockSpec((tile_b, in_dim), lambda i: (i, 0)),   # activations (f32)
                pl.BlockSpec((in_dim, h_pad), lambda i: (0, 0)),    # we1 (resident)
                pl.BlockSpec((1, h_pad), lambda i: (0, 0)),         # be1
                pl.BlockSpec((h_pad, h_pad), lambda i: (0, 0)),     # w_mid
                pl.BlockSpec((1, h_pad), lambda i: (0, 0)),         # b_mid
                pl.BlockSpec((h_pad, out_dim), lambda i: (0, 0)),   # wd2
                pl.BlockSpec((1, out_dim), lambda i: (0, 0)),       # bd2
            ],
            out_specs=pl.BlockSpec((tile_b, out_dim), lambda i: (i, 0)),
        ),
        compiler_params=pltpu.CompilerParams(
            dimension_semantics=("parallel",),      # v7x dual-TC batch split
            vmem_limit_bytes=vmem_limit),
        cost_estimate=pl.CostEstimate(
            flops=flops, transcendentals=0, bytes_accessed=bytes_accessed),
    )(w_in, we1_p, be1_p, wmid_p, bmid_p, wd2_p, bd2_p)

    return out if bs_pad == bs else out[:bs]

    # TODO(synk): if the consumer of recon is cheap (MSE vs a target,
    # residual), fuse it here as an extra output to avoid another HBM pass.


# --------------------------- params / reference ------------------------------


def init_params(key, in_dim, hidden, latent):
    """Deterministic PyTorch-Linear-style init (unpadded, f32)."""
    ks = jax.random.split(key, 8)

    def lin(kw, kb, fan_in, fan_out):
        bound = 1.0 / jnp.sqrt(float(fan_in))
        W = jax.random.uniform(kw, (fan_in, fan_out), jnp.float32, -bound, bound)
        b = jax.random.uniform(kb, (1, fan_out), jnp.float32, -bound, bound)
        return W, b

    we1, be1 = lin(ks[0], ks[1], in_dim, hidden)    # encoder layer 1
    we2, be2 = lin(ks[2], ks[3], hidden, latent)    # encoder layer 2
    wd1, bd1 = lin(ks[4], ks[5], latent, hidden)    # decoder layer 1
    wd2, bd2 = lin(ks[6], ks[7], hidden, in_dim)    # decoder layer 2
    return (we1, be1, we2, be2, wd1, bd1, wd2, bd2)


def reference_forward(w, raw_params):
    """Pure-JAX f32 reference (unfolded, unpadded) for correctness check."""
    we1, be1, we2, be2, wd1, bd1, wd2, bd2 = raw_params
    h = jnp.maximum(w @ we1 + be1, 0.0)
    z = h @ we2 + be2
    g = jnp.maximum(z @ wd1 + bd1, 0.0)
    return g @ wd2 + bd2


# TODO(synk): get_w_from_traj / w_to_SE3 / compute_mse / fit_GMM / sample
# (SE(3) exp/log maps, Gaussian bases, GMM fitting) are host-side training &
# generation utilities outside forward(); only encode+decode is the kernel.

if __name__ == "__main__":
    # Shapes implied by the module: b = 30 Gaussian basis functions,
    # w = (bs, (b+1)*6) = (bs, 186) flattened LfD weights.
    bs = 8
    b = 30
    in_dim = (b + 1) * 6          # 186
    hidden = 64
    latent = 16

    key = jax.random.PRNGKey(0)
    k_w, k_p = jax.random.split(key)
    w = jax.random.normal(k_w, (bs, in_dim), dtype=jnp.float32)
    raw_params = init_params(k_p, in_dim, hidden, latent)
    packed_params = prepare_params(raw_params)

    recon = se3mmp_forward(w, packed_params)
    recon = jax.block_until_ready(recon)

    ref = reference_forward(w, raw_params)
    assert recon.shape == (bs, in_dim)
    # bf16 matmul inputs -> loosened tolerance vs. the f32 reference.
    assert jnp.allclose(recon, ref, atol=5e-2, rtol=5e-2), (
        float(jnp.max(jnp.abs(recon - ref))))

    print("KERNEL_OK")
</pallas_src>

<mosaic_0001>
module attributes {stable_mosaic.version = 11 : i64} {
  func.func @_mmp_forward_kernel(%arg0: i32, %arg1: memref<16x186xf32, #tpu.memory_space<vmem>>, %arg2: memref<186x128xbf16, #tpu.memory_space<vmem>>, %arg3: memref<1x128xf32, #tpu.memory_space<vmem>>, %arg4: memref<128x128xbf16, #tpu.memory_space<vmem>>, %arg5: memref<1x128xf32, #tpu.memory_space<vmem>>, %arg6: memref<128x186xbf16, #tpu.memory_space<vmem>>, %arg7: memref<1x186xf32, #tpu.memory_space<vmem>>, %arg8: memref<16x186xf32, #tpu.memory_space<vmem>>) attributes {dimension_semantics = [#tpu.dimension_semantics<parallel>], iteration_bounds = array<i64: 1>, scalar_prefetch = 0 : i64, scratch_operands = 0 : i64, tpu.core_type = #tpu.core_type<tc>, window_params = [{transform_indices = @transform_0, window_bounds = array<i64: 16, 186>}, {pipeline_mode = #tpu.pipeline_mode<synchronous>, transform_indices = @transform_1, window_bounds = array<i64: 186, 128>}, {pipeline_mode = #tpu.pipeline_mode<synchronous>, transform_indices = @transform_2, window_bounds = array<i64: 1, 128>}, {pipeline_mode = #tpu.pipeline_mode<synchronous>, transform_indices = @transform_3, window_bounds = array<i64: 128, 128>}, {pipeline_mode = #tpu.pipeline_mode<synchronous>, transform_indices = @transform_4, window_bounds = array<i64: 1, 128>}, {pipeline_mode = #tpu.pipeline_mode<synchronous>, transform_indices = @transform_5, window_bounds = array<i64: 128, 186>}, {pipeline_mode = #tpu.pipeline_mode<synchronous>, transform_indices = @transform_6, window_bounds = array<i64: 1, 186>}, {transform_indices = @transform_7, window_bounds = array<i64: 16, 186>}]} {
    %c0 = arith.constant 0 : index
    %c0_0 = arith.constant 0 : index
    %0 = vector.load %arg1[%c0, %c0_0] : memref<16x186xf32, #tpu.memory_space<vmem>>, vector<16x186xf32>
    %1 = arith.truncf %0 : vector<16x186xf32> to vector<16x186xbf16>
    %c0_1 = arith.constant 0 : index
    %c0_2 = arith.constant 0 : index
    %2 = vector.load %arg2[%c0_1, %c0_2] : memref<186x128xbf16, #tpu.memory_space<vmem>>, vector<186x128xbf16>
    %cst = arith.constant dense<0.000000e+00> : vector<16x128xf32>
    %3 = tpu.matmul %1, %2, %cst {dimension_numbers = #tpu.dot_dimension_numbers<[1], [0], [0], [1], [0, 0, 1, 1], [], []>} : vector<16x186xbf16>, vector<186x128xbf16>, vector<16x128xf32> -> vector<16x128xf32>
    %c0_3 = arith.constant 0 : index
    %c0_4 = arith.constant 0 : index
    %4 = vector.load %arg3[%c0_3, %c0_4] : memref<1x128xf32, #tpu.memory_space<vmem>>, vector<1x128xf32>
    %5 = vector.broadcast %4 : vector<1x128xf32> to vector<16x128xf32>
    %6 = arith.addf %3, %5 : vector<16x128xf32>
    %cst_5 = arith.constant 0.000000e+00 : f32
    %7 = vector.broadcast %cst_5 : f32 to vector<16x128xf32>
    %8 = arith.maximumf %6, %7 : vector<16x128xf32>
    %9 = arith.truncf %8 : vector<16x128xf32> to vector<16x128xbf16>
    %c0_6 = arith.constant 0 : index
    %c0_7 = arith.constant 0 : index
    %10 = vector.load %arg4[%c0_6, %c0_7] : memref<128x128xbf16, #tpu.memory_space<vmem>>, vector<128x128xbf16>
    %cst_8 = arith.constant dense<0.000000e+00> : vector<16x128xf32>
    %11 = tpu.matmul %9, %10, %cst_8 {dimension_numbers = #tpu.dot_dimension_numbers<[1], [0], [0], [1], [0, 0, 1, 1], [], []>} : vector<16x128xbf16>, vector<128x128xbf16>, vector<16x128xf32> -> vector<16x128xf32>
    %c0_9 = arith.constant 0 : index
    %c0_10 = arith.constant 0 : index
    %12 = vector.load %arg5[%c0_9, %c0_10] : memref<1x128xf32, #tpu.memory_space<vmem>>, vector<1x128xf32>
    %13 = vector.broadcast %12 : vector<1x128xf32> to vector<16x128xf32>
    %14 = arith.addf %11, %13 : vector<16x128xf32>
    %cst_11 = arith.constant 0.000000e+00 : f32
    %15 = vector.broadcast %cst_11 : f32 to vector<16x128xf32>
    %16 = arith.maximumf %14, %15 : vector<16x128xf32>
    %17 = arith.truncf %16 : vector<16x128xf32> to vector<16x128xbf16>
    %c0_12 = arith.constant 0 : index
    %c0_13 = arith.constant 0 : index
    %18 = vector.load %arg6[%c0_12, %c0_13] : memref<128x186xbf16, #tpu.memory_space<vmem>>, vector<128x186xbf16>
    %cst_14 = arith.constant dense<0.000000e+00> : vector<16x186xf32>
    %19 = tpu.matmul %17, %18, %cst_14 {dimension_numbers = #tpu.dot_dimension_numbers<[1], [0], [0], [1], [0, 0, 1, 1], [], []>} : vector<16x128xbf16>, vector<128x186xbf16>, vector<16x186xf32> -> vector<16x186xf32>
    %c0_15 = arith.constant 0 : index
    %c0_16 = arith.constant 0 : index
    %20 = vector.load %arg7[%c0_15, %c0_16] : memref<1x186xf32, #tpu.memory_space<vmem>>, vector<1x186xf32>
    %21 = vector.broadcast %20 : vector<1x186xf32> to vector<16x186xf32>
    %22 = arith.addf %19, %21 : vector<16x186xf32>
    %c0_17 = arith.constant 0 : index
    %c0_18 = arith.constant 0 : index
    %23 = vector.load %arg8[%c0_17, %c0_18] : memref<16x186xf32, #tpu.memory_space<vmem>>, vector<16x186xf32>
    tpu.vector_store %arg8[%c0_17, %c0_18], %22 {strides = array<i32>} : memref<16x186xf32, #tpu.memory_space<vmem>>, vector<16x186xf32>,
    return
  }
  func.func @transform_0(%arg0: i32) -> (i32, i32) {
    %c0_i32 = arith.constant 0 : i32
    %c0_i32_0 = arith.constant 0 : i32
    return %arg0, %c0_i32 : i32, i32
  }
  func.func @transform_1(%arg0: i32) -> (i32, i32) {
    %c0_i32 = arith.constant 0 : i32
    %c0_i32_0 = arith.constant 0 : i32
    %c0_i32_1 = arith.constant 0 : i32
    return %c0_i32, %c0_i32_0 : i32, i32
  }
  func.func @transform_2(%arg0: i32) -> (i32, i32) {
    %c0_i32 = arith.constant 0 : i32
    %c0_i32_0 = arith.constant 0 : i32
    %c0_i32_1 = arith.constant 0 : i32
    return %c0_i32, %c0_i32_0 : i32, i32
  }
  func.func @transform_3(%arg0: i32) -> (i32, i32) {
    %c0_i32 = arith.constant 0 : i32
    %c0_i32_0 = arith.constant 0 : i32
    %c0_i32_1 = arith.constant 0 : i32
    return %c0_i32, %c0_i32_0 : i32, i32
  }
  func.func @transform_4(%arg0: i32) -> (i32, i32) {
    %c0_i32 = arith.constant 0 : i32
    %c0_i32_0 = arith.constant 0 : i32
    %c0_i32_1 = arith.constant 0 : i32
    return %c0_i32, %c0_i32_0 : i32, i32
  }
  func.func @transform_5(%arg0: i32) -> (i32, i32) {
    %c0_i32 = arith.constant 0 : i32
    %c0_i32_0 = arith.constant 0 : i32
    %c0_i32_1 = arith.constant 0 : i32
    return %c0_i32, %c0_i32_0 : i32, i32
  }
  func.func @transform_6(%arg0: i32) -> (i32, i32) {
    %c0_i32 = arith.constant 0 : i32
    %c0_i32_0 = arith.constant 0 : i32
    %c0_i32_1 = arith.constant 0 : i32
    return %c0_i32, %c0_i32_0 : i32, i32
  }
  func.func @transform_7(%arg0: i32) -> (i32, i32) {
    %c0_i32 = arith.constant 0 : i32
    %c0_i32_0 = arith.constant 0 : i32
    return %arg0, %c0_i32 : i32, i32
  }
}

</mosaic_0001>

<llo_original>
// kernel: se3mmp_forward.1
$region0: #{se3mmp_forward.1}
  #allocation0 [shape = 'u32[]', space=smem, size = 0x4, offset = 0x4, fixed_abs, tag = 'smem constant byte address 0x4 - core index']
  #allocation1 [shape = 'u32[72,128]{1,0:T(1,128)}', space=vmem, size = 0x9000, scoped, tag = 'internal scratch']
  %s0 = inlined_call_operand.vmem [shape: f32[16,186], index: 0, kind: input, shape index: {}]
  %s1 = inlined_call_operand.vmem [shape: bf16[186,128], index: 1, kind: input, shape index: {}]
  %s2 = inlined_call_operand.vmem [shape: f32[1,128], index: 2, kind: input, shape index: {}]
  %s3 = inlined_call_operand.vmem [shape: bf16[128,128], index: 3, kind: input, shape index: {}]
  %s4 = inlined_call_operand.vmem [shape: f32[1,128], index: 4, kind: input, shape index: {}]
  %s5 = inlined_call_operand.vmem [shape: bf16[128,186], index: 5, kind: input, shape index: {}]
  %s6 = inlined_call_operand.vmem [shape: f32[1,186], index: 6, kind: input, shape index: {}]
  %s7 = inlined_call_operand.vmem [shape: f32[16,186], index: 7, kind: output, shape index: {}]
  %s8 = sld [smem:[#allocation0]]
  $region38: #{se3mmp_forward.1} parent=0
    _
  %s10 = ssub.s32 1, %s8
  %s11 = scalar_select 0, %s10, %s8
  // Predicated region
  $region2: #{se3mmp_forward.1} parent=0 // pred_check
    _
  $region3: #{se3mmp_forward.1} parent=0 // pred_check_branch
    %13 = sbr.rel (0) target = $region5
  $region4: #{se3mmp_forward.1} parent=0 // pred_region
    _
  $region5: #{se3mmp_forward.1} parent=0 // pred_fallthru
    _
  // Predicated region
  $region6: #{se3mmp_forward.1} parent=0 // pred_check
    _
  $region7: #{se3mmp_forward.1} parent=0 // pred_check_branch
    %15 = sbr.rel (0) target = $region9
  $region8: #{se3mmp_forward.1} parent=0 // pred_region
    _
  $region9: #{se3mmp_forward.1} parent=0 // pred_fallthru
    _
  // Predicated region
  $region10: #{se3mmp_forward.1} parent=0 // pred_check
    _
  $region11: #{se3mmp_forward.1} parent=0 // pred_check_branch
    %17 = sbr.rel (0) target = $region13
  $region12: #{se3mmp_forward.1} parent=0 // pred_region
    _
  $region13: #{se3mmp_forward.1} parent=0 // pred_fallthru
    _
  // Predicated region
  $region14: #{se3mmp_forward.1} parent=0 // pred_check
    _
  $region15: #{se3mmp_forward.1} parent=0 // pred_check_branch
    %19 = sbr.rel (0) target = $region17
  $region16: #{se3mmp_forward.1} parent=0 // pred_region
    _
  $region17: #{se3mmp_forward.1} parent=0 // pred_fallthru
    _
  // Predicated region
  $region18: #{se3mmp_forward.1} parent=0 // pred_check
    _
  $region19: #{se3mmp_forward.1} parent=0 // pred_check_branch
    %21 = sbr.rel (0) target = $region21
  $region20: #{se3mmp_forward.1} parent=0 // pred_region
    _
  $region21: #{se3mmp_forward.1} parent=0 // pred_fallthru
    _
  // Predicated region
  $region22: #{se3mmp_forward.1} parent=0 // pred_check
    _
  $region23: #{se3mmp_forward.1} parent=0 // pred_check_branch
    %23 = sbr.rel (0) target = $region25
  $region24: #{se3mmp_forward.1} parent=0 // pred_region
    _
  $region25: #{se3mmp_forward.1} parent=0 // pred_fallthru
    _
  // Predicated region
  $region26: #{se3mmp_forward.1} parent=0 // pred_check
    _
  $region27: #{se3mmp_forward.1} parent=0 // pred_check_branch
    %25 = sbr.rel (0) target = $region29
  $region28: #{se3mmp_forward.1} parent=0 // pred_region
    _
  $region29: #{se3mmp_forward.1} parent=0 // pred_fallthru
    _
  %v27 = vld [vmem:[%s0] sm:$0xff]
  %v28 = vld [vmem:[%s0 + $0x8] sm:$0xff]
  %v29 = vld [vmem:[%s0 + $0x10] sm:$0xff]
  %v30 = vld [vmem:[%s0 + $0x18] sm:$0xff]
  %v31 = vpack.c.bf16 %v29, %v27
  %v32 = vpack.c.bf16 %v30, %v28
  %v33 = vld [vmem:[%s1] sm:$0xf]
  %v34 = vld [vmem:[%s1 + $0x4] sm:$0xf]
  %v35 = vld [vmem:[%s1 + $0x8] sm:$0xf]
  %v36 = vld [vmem:[%s1 + $0xc] sm:$0xf]
  %v37 = vld [vmem:[%s1 + $0x10] sm:$0xf]
  %v38 = vld [vmem:[%s1 + $0x14] sm:$0xf]
  %v39 = vld [vmem:[%s1 + $0x18] sm:$0xf]
  %v40 = vld [vmem:[%s1 + $0x1c] sm:$0xf]
  %v41 = vld [vmem:[%s1 + $0x20] sm:$0xf]
  %v42 = vld [vmem:[%s1 + $0x24] sm:$0xf]
  %v43 = vld [vmem:[%s1 + $0x28] sm:$0xf]
  %v44 = vld [vmem:[%s1 + $0x2c] sm:$0xf]
  %v45 = vld [vmem:[%s1 + $0x30] sm:$0xf]
  %v46 = vld [vmem:[%s1 + $0x34] sm:$0xf]
  %v47 = vld [vmem:[%s1 + $0x38] sm:$0xf]
  %v48 = vld [vmem:[%s1 + $0x3c] sm:$0xf]
  %v49 = vld [vmem:[%s1 + $0x40] sm:$0xf]
  %v50 = vld [vmem:[%s1 + $0x44] sm:$0xf]
  %v51 = vld [vmem:[%s1 + $0x48] sm:$0xf]
  %v52 = vld [vmem:[%s1 + $0x4c] sm:$0xf]
  %v53 = vld [vmem:[%s1 + $0x50] sm:$0xf]
  %v54 = vld [vmem:[%s1 + $0x54] sm:$0xf]
  %v55 = vld [vmem:[%s1 + $0x58] sm:$0xf]
  %v56 = vld [vmem:[%s1 + $0x5c] sm:$0x1]
  %v57 = vld [vmem:[%s2] sm:$0x1]
  %v59 = vperm.slane %v57, 0
  %v85 = vunpack.c.l.b16 %v33
  %v86 = vunpack.c.l.b16 %v34
  %v87 = vunpack.c.l.b16 %v35
  %v88 = vunpack.c.l.b16 %v36
  %v89 = vunpack.c.l.b16 %v37
  %v90 = vunpack.c.l.b16 %v38
  %v91 = vunpack.c.l.b16 %v39
  %v92 = vunpack.c.l.b16 %v40
  %v93 = vunpack.c.l.b16 %v41
  %v94 = vunpack.c.l.b16 %v42
  %v95 = vunpack.c.l.b16 %v43
  %v96 = vunpack.c.l.b16 %v44
  %v97 = vunpack.c.l.b16 %v45
  %v98 = vunpack.c.l.b16 %v46
  %v99 = vunpack.c.l.b16 %v47
  %v100 = vunpack.c.l.b16 %v48
  %v101 = vunpack.c.l.b16 %v49
  %v102 = vunpack.c.l.b16 %v50
  %v103 = vunpack.c.l.b16 %v51
  %v104 = vunpack.c.l.b16 %v52
  %v105 = vunpack.c.l.b16 %v53
  %v106 = vunpack.c.l.b16 %v54
  %v107 = vunpack.c.l.b16 %v55
  %v108 = vunpack.c.l.b16 %v56
  %v109 = vpack.c.b16 %v86, %v85
  %v110 = vpack.c.b16 %v88, %v87
  %v111 = vpack.c.b16 %v90, %v89
  %v112 = vpack.c.b16 %v92, %v91
  %v113 = vpack.c.b16 %v94, %v93
  %v114 = vpack.c.b16 %v96, %v95
  %v115 = vpack.c.b16 %v98, %v97
  %v116 = vpack.c.b16 %v100, %v99
  %v117 = vpack.c.b16 %v102, %v101
  %v118 = vpack.c.b16 %v104, %v103
  %v119 = vpack.c.b16 %v106, %v105
  %v120 = vpack.c.b16 %v108, %v107
  %vm132 = vcmask 474112
  %v134 = vsel %vm132, %v32, 0
  %vm136 = vcmask 1044480
  %v138 = vsel %vm136, %v120, 0
  %140 = vmatpush.bf16.msra.mxu0 %v116
  %141 = vmatpush.bf16.msra.mxu0 %v115
  %142 = vmatpush.bf16.msra.mxu0 %v114
  %143 = vmatpush.bf16.msra.mxu0 %v113
  %144 = vmatpush.bf16.msra.mxu0 %v112
  %145 = vmatpush.bf16.msra.mxu0 %v111
  %146 = vmatpush.bf16.msra.mxu0 %v110
  %147 = vmatpush.bf16.msra.mxu0 %v109
  %148 = vmatmul.bf16.gmra.mxu0 %v31
  %v149 = vpop.f32.mrf.mxu0
  %v150 = vadd.f32 %v59, %v149
  %v151 = vpop.f32.mrf.mxu0
  %v152 = vadd.f32 %v59, %v151
  %153 = vdwg.mxu0
  %154 = vmatpush.bf16.msra.mxu0 0
  %155 = vmatpush.bf16.msra.mxu0 0
  %156 = vmatpush.bf16.msra.mxu0 0
  %157 = vmatpush.bf16.msra.mxu0 0
  %158 = vmatpush.bf16.msra.mxu0 %v138
  %159 = vmatpush.bf16.msra.mxu0 %v119
  %160 = vmatpush.bf16.msra.mxu0 %v118
  %161 = vmatpush.bf16.msra.mxu0 %v117
  %162 = vmatmul.bf16.gmra.mxu0 %v134
  %v163 = vpop.f32.mrf.mxu0
  %v164 = vadd.f32 %v150, %v163
  %v165 = vpop.f32.mrf.mxu0
  %v166 = vadd.f32 %v152, %v165
  %167 = vdwg.mxu0
  %v168 = vmax.f32 %v164, 0.0
  %v169 = vmax.f32 %v166, 0.0
  %v170 = vpack.c.bf16 %v169, %v168
  %v171 = vld [vmem:[%s3] sm:$0xf]
  %v172 = vld [vmem:[%s3 + $0x4] sm:$0xf]
  %v173 = vld [vmem:[%s3 + $0x8] sm:$0xf]
  %v174 = vld [vmem:[%s3 + $0xc] sm:$0xf]
  %v175 = vld [vmem:[%s3 + $0x10] sm:$0xf]
  %v176 = vld [vmem:[%s3 + $0x14] sm:$0xf]
  %v177 = vld [vmem:[%s3 + $0x18] sm:$0xf]
  %v178 = vld [vmem:[%s3 + $0x1c] sm:$0xf]
  %v179 = vld [vmem:[%s3 + $0x20] sm:$0xf]
  %v180 = vld [vmem:[%s3 + $0x24] sm:$0xf]
  %v181 = vld [vmem:[%s3 + $0x28] sm:$0xf]
  %v182 = vld [vmem:[%s3 + $0x2c] sm:$0xf]
  %v183 = vld [vmem:[%s3 + $0x30] sm:$0xf]
  %v184 = vld [vmem:[%s3 + $0x34] sm:$0xf]
  %v185 = vld [vmem:[%s3 + $0x38] sm:$0xf]
  %v186 = vld [vmem:[%s3 + $0x3c] sm:$0xf]
  %v187 = vld [vmem:[%s4] sm:$0x1]
  %v189 = vperm.slane %v187, 0
  %v207 = vunpack.c.l.b16 %v171
  %v208 = vunpack.c.l.b16 %v172
  %v209 = vunpack.c.l.b16 %v173
  %v210 = vunpack.c.l.b16 %v174
  %v211 = vunpack.c.l.b16 %v175
  %v212 = vunpack.c.l.b16 %v176
  %v213 = vunpack.c.l.b16 %v177
  %v214 = vunpack.c.l.b16 %v178
  %v215 = vunpack.c.l.b16 %v179
  %v216 = vunpack.c.l.b16 %v180
  %v217 = vunpack.c.l.b16 %v181
  %v218 = vunpack.c.l.b16 %v182
  %v219 = vunpack.c.l.b16 %v183
  %v220 = vunpack.c.l.b16 %v184
  %v221 = vunpack.c.l.b16 %v185
  %v222 = vunpack.c.l.b16 %v186
  %v223 = vpack.c.b16 %v208, %v207
  %v224 = vpack.c.b16 %v210, %v209
  %v225 = vpack.c.b16 %v212, %v211
  %v226 = vpack.c.b16 %v214, %v213
  %v227 = vpack.c.b16 %v216, %v215
  %v228 = vpack.c.b16 %v218, %v217
  %v229 = vpack.c.b16 %v220, %v219
  %v230 = vpack.c.b16 %v222, %v221
  %239 = vmatpush.bf16.msra.mxu0 %v230
  %240 = vmatpush.bf16.msra.mxu0 %v229
  %241 = vmatpush.bf16.msra.mxu0 %v228
  %242 = vmatpush.bf16.msra.mxu0 %v227
  %243 = vmatpush.bf16.msra.mxu0 %v226
  %244 = vmatpush.bf16.msra.mxu0 %v225
  %245 = vmatpush.bf16.msra.mxu0 %v224
  %246 = vmatpush.bf16.msra.mxu0 %v223
  %247 = vmatmul.bf16.gmra.mxu0 %v170
  %v248 = vpop.f32.mrf.mxu0
  %v249 = vadd.f32 %v189, %v248
  %v250 = vpop.f32.mrf.mxu0
  %v251 = vadd.f32 %v189, %v250
  %252 = vdwg.mxu0
  %v253 = vmax.f32 %v249, 0.0
  %v254 = vmax.f32 %v251, 0.0
  %v255 = vpack.c.bf16 %v254, %v253
  %v256 = vld [vmem:[%s5] sm:$0xff]
  %v257 = vld [vmem:[%s5 + $0x8] sm:$0xff]
  %v258 = vld [vmem:[%s5 + $0x10] sm:$0xff]
  %v259 = vld [vmem:[%s5 + $0x18] sm:$0xff]
  %v260 = vld [vmem:[%s5 + $0x20] sm:$0xff]
  %v261 = vld [vmem:[%s5 + $0x28] sm:$0xff]
  %v262 = vld [vmem:[%s5 + $0x30] sm:$0xff]
  %v263 = vld [vmem:[%s5 + $0x38] sm:$0xff]
  %v264 = vld [vmem:[%s5 + $0x40] sm:$0xff]
  %v265 = vld [vmem:[%s5 + $0x48] sm:$0xff]
  %v266 = vld [vmem:[%s5 + $0x50] sm:$0xff]
  %v267 = vld [vmem:[%s5 + $0x58] sm:$0xff]
  %v268 = vld [vmem:[%s5 + $0x60] sm:$0xff]
  %v269 = vld [vmem:[%s5 + $0x68] sm:$0xff]
  %v270 = vld [vmem:[%s5 + $0x70] sm:$0xff]
  %v271 = vld [vmem:[%s5 + $0x78] sm:$0xff]
  %v272 = vld [vmem:[%s6] sm:$0x3]
  %v274 = vperm.slane %v272, 0
  %v275 = vperm.slane %v272, 1
  %v294 = vunpack.c.l.b16 %v256
  %v295 = vunpack.c.h.b16 %v256
  %v296 = vunpack.c.l.b16 %v257
  %v297 = vunpack.c.h.b16 %v257
  %v298 = vunpack.c.l.b16 %v258
  %v299 = vunpack.c.h.b16 %v258
  %v300 = vunpack.c.l.b16 %v259
  %v301 = vunpack.c.h.b16 %v259
  %v302 = vunpack.c.l.b16 %v260
  %v303 = vunpack.c.h.b16 %v260
  %v304 = vunpack.c.l.b16 %v261
  %v305 = vunpack.c.h.b16 %v261
  %v306 = vunpack.c.l.b16 %v262
  %v307 = vunpack.c.h.b16 %v262
  %v308 = vunpack.c.l.b16 %v263
  %v309 = vunpack.c.h.b16 %v263
  %v310 = vunpack.c.l.b16 %v264
  %v311 = vunpack.c.h.b16 %v264
  %v312 = vunpack.c.l.b16 %v265
  %v313 = vunpack.c.h.b16 %v265
  %v314 = vunpack.c.l.b16 %v266
  %v315 = vunpack.c.h.b16 %v266
  %v316 = vunpack.c.l.b16 %v267
  %v317 = vunpack.c.h.b16 %v267
  %v318 = vunpack.c.l.b16 %v268
  %v319 = vunpack.c.h.b16 %v268
  %v320 = vunpack.c.l.b16 %v269
  %v321 = vunpack.c.h.b16 %v269
  %v322 = vunpack.c.l.b16 %v270
  %v323 = vunpack.c.h.b16 %v270
  %v324 = vunpack.c.l.b16 %v271
  %v325 = vunpack.c.h.b16 %v271
  %v326 = vpack.c.b16 %v296, %v294
  %v327 = vpack.c.b16 %v297, %v295
  %v328 = vpack.c.b16 %v300, %v298
  %v329 = vpack.c.b16 %v301, %v299
  %v330 = vpack.c.b16 %v304, %v302
  %v331 = vpack.c.b16 %v305, %v303
  %v332 = vpack.c.b16 %v308, %v306
  %v333 = vpack.c.b16 %v309, %v307
  %v334 = vpack.c.b16 %v312, %v310
  %v335 = vpack.c.b16 %v313, %v311
  %v336 = vpack.c.b16 %v316, %v314
  %v337 = vpack.c.b16 %v317, %v315
  %v338 = vpack.c.b16 %v320, %v318
  %v339 = vpack.c.b16 %v321, %v319
  %v340 = vpack.c.b16 %v324, %v322
  %v341 = vpack.c.b16 %v325, %v323
  %358 = vmatpush.bf16.msra.mxu0 %v340
  %359 = vmatpush.bf16.msra.mxu0 %v338
  %360 = vmatpush.bf16.msra.mxu0 %v336
  %361 = vmatpush.bf16.msra.mxu0 %v334
  %362 = vmatpush.bf16.msra.mxu0 %v332
  %363 = vmatpush.bf16.msra.mxu0 %v330
  %364 = vmatpush.bf16.msra.mxu0 %v328
  %365 = vmatpush.bf16.msra.mxu0 %v326
  %366 = vmatmul.bf16.gmra.mxu0 %v255
  %v367 = vpop.f32.mrf.mxu0
  %v368 = vadd.f32 %v274, %v367
  %v369 = vpop.f32.mrf.mxu0
  %v370 = vadd.f32 %v274, %v369
  %371 = vdwg.mxu0
  %372 = vmatpush.bf16.msra.mxu0 %v341
  %373 = vmatpush.bf16.msra.mxu0 %v339
  %374 = vmatpush.bf16.msra.mxu0 %v337
  %375 = vmatpush.bf16.msra.mxu0 %v335
  %376 = vmatpush.bf16.msra.mxu0 %v333
  %377 = vmatpush.bf16.msra.mxu0 %v331
  %378 = vmatpush.bf16.msra.mxu0 %v329
  %379 = vmatpush.bf16.msra.mxu0 %v327
  %380 = vmatmul.bf16.gmra.mxu0 %v255
  %v381 = vpop.f32.mrf.mxu0
  %v382 = vadd.f32 %v275, %v381
  %v383 = vpop.f32.mrf.mxu0
  %v384 = vadd.f32 %v275, %v383
  %385 = vdwg.mxu0
  %386 = vst [vmem:[%s7] sm:$0xff] %v368
  %387 = vst.msk [vmem:[%s7 + $0x8] sm:$0xff] %vm132, %v382
  %388 = vst [vmem:[%s7 + $0x10] sm:$0xff] %v370
  %389 = vst.msk [vmem:[%s7 + $0x18] sm:$0xff] %vm132, %v384
  // Predicated region
  $region30: #{se3mmp_forward.1} parent=0 // pred_check
    _
  $region31: #{se3mmp_forward.1} parent=0 // pred_check_branch
    %391 = sbr.rel (0) target = $region33
  $region32: #{se3mmp_forward.1} parent=0 // pred_region
    _
  $region33: #{se3mmp_forward.1} parent=0 // pred_fallthru
    _
  // Predicated region
  $region34: #{se3mmp_forward.1} parent=0 // pred_check
    _
  $region35: #{se3mmp_forward.1} parent=0 // pred_check_branch
    %393 = sbr.rel (0) target = $region37
  $region36: #{se3mmp_forward.1} parent=0 // pred_region
    _
  $region37: #{se3mmp_forward.1} parent=0 // pred_fallthru
    _

</llo_original>
